<compile_context>
chip_gen: v5e
topology: v5e:2x2
jax: 0.10.0
libtpu: 0.0.40
codegen_flags: <defaults>
</compile_context>

<pallas_src>
import functools

import jax
import jax.numpy as jnp
from jax.experimental import pallas as pl
from jax.experimental.pallas import tpu as pltpu


def _lxr_loss_kernel(user_ref, mask_ref, w2sel_ref, b2sel_ref, w1_ref, b1_ref,
                     out_ref, *, block_b, valid_rows):
    i = pl.program_id(0)

    user_bf = user_ref[...]                      # [bB, N] bf16
    mask_bf = mask_ref[...]                      # [bB, N] bf16

    # f32 copies for the l1 statistic (user is binary so exact; pos_mask is
    # already bf16-quantized by the streaming dtype).
    user_f = user_bf.astype(jnp.float32)
    x_pos_f = user_f * mask_bf.astype(jnp.float32)         # [bB, N] f32
    x_pos_bf = x_pos_f.astype(jnp.bfloat16)                 # MXU operand

    w1 = w1_ref[...]                                        # [N, H] bf16
    b1 = b1_ref[...]                                        # [1, H] f32

    # Two bf16 MXU passes; x_neg @ W1 is recovered by linearity as U - A.
    a = jnp.dot(x_pos_bf, w1, preferred_element_type=jnp.float32)   # [bB, H]
    u = jnp.dot(user_bf, w1, preferred_element_type=jnp.float32)    # [bB, H]

    h_pos = jnp.tanh(a + b1)                                # [bB, H] f32 (EUP)
    h_neg = jnp.tanh((u - a) + b1)                          # [bB, H] f32

    # Layer 2 collapsed to the gathered column per row:
    #   logit = <h, W2[:, items_ids[row]]> + b2[items_ids[row]]
    w2c = w2sel_ref[...]                                    # [bB, H] f32
    b2c = b2sel_ref[...]                                    # [bB, 1] f32
    logit_pos = jnp.sum(h_pos * w2c, axis=-1, keepdims=True) + b2c  # [bB, 1]
    logit_neg = jnp.sum(h_neg * w2c, axis=-1, keepdims=True) + b2c  # [bB, 1]

    # log(sigmoid(z)) = min(z, 0) - log1p(exp(-|z|))   (stable, no -inf)
    def log_sigmoid(z):
        return jnp.minimum(z, 0.0) - jnp.log1p(jnp.exp(-jnp.abs(z)))

    # Mask out zero-padded tail rows (batch padded up to a tile multiple).
    row = jax.lax.broadcasted_iota(jnp.int32, (block_b, 1), 0) + i * block_b
    valid = (row < valid_rows).astype(jnp.float32)          # [bB, 1]

    s_logpos = jnp.sum(log_sigmoid(logit_pos) * valid)
    s_logneg = jnp.sum(log_sigmoid(logit_neg) * valid)

    sel = (user_f > 0.0).astype(jnp.float32)                # padded rows: all 0
    s_xpos = jnp.sum(x_pos_f * sel)
    s_cnt = jnp.sum(sel)

    # Lane-dense per-tile partials: quantity q broadcast across all lanes of
    # sublane q of an [8,128] block.  No carried accumulator -> batch axis is
    # fully parallel; the wrapper does the final (num_tiles x 4) reduction.
    sub = jax.lax.broadcasted_iota(jnp.int32, (8, 128), 0)
    tile = (jnp.where(sub == 0, s_logpos, 0.0)
            + jnp.where(sub == 1, s_logneg, 0.0)
            + jnp.where(sub == 2, s_xpos, 0.0)
            + jnp.where(sub == 3, s_cnt, 0.0))
    out_ref[...] = tile


def _default_block_b(B, N, H):
    """Batch-tile rows sized against a conservative scoped-VMEM budget."""
    per_row = 2 * (2 * N * 2)           # user + pos_mask, bf16, double-buffered
    per_row += 2 * (H * 4 + 4)          # w2_sel + b2_sel, f32, double-buffered
    per_row += 3 * N * 4                # f32 [bB,N] temporaries (x_pos, sel, ...)
    per_row += 6 * H * 4                # f32 [bB,H] temporaries (A, U, h's, ...)
    budget = 24 * 1024 * 1024           # leave headroom for resident W1/b1
    bb = budget // max(per_row, 1)
    bb = max(16, min(512, int(bb)))
    bb = (bb // 16) * 16                # bf16 sublane packing friendly
    bb = min(bb, max(16, -(-B // 16) * 16))   # never wider than the padded batch
    return int(bb)


def lxr_loss(user_tensors, items_tensors, items_ids, pos_masks,
             w1, b1, w2, b2, *, lambda_pos, lambda_neg, alpha,
             block_b=None, input_dtype=jnp.bfloat16):
    """Returns (combined_loss, pos_loss, neg_loss, l1) as f32 scalars."""
    # The dense one-hot items_tensors is redundant given items_ids: the per-row
    # score gather is realized by gathering the needed W2 column / b2 entry.
    del items_tensors
    B, N = user_tensors.shape
    H = w1.shape[1]

    if block_b is None:
        block_b = _default_block_b(B, N, H)
    block_b = max(16, -(-int(block_b) // 16) * 16)   # multiple of 16

    grid_b = -(-B // block_b)
    B_pad = grid_b * block_b

    def pad_rows(x):
        if x.shape[0] == B_pad:
            return x
        pad = [(0, B_pad - x.shape[0])] + [(0, 0)] * (x.ndim - 1)
        return jnp.pad(x, pad)

    # bf16 streaming for the two dominant [B, N] inputs (user is binary -> exact).
    user_p = pad_rows(user_tensors).astype(input_dtype)
    mask_p = pad_rows(pos_masks).astype(input_dtype)

    # Per-row gathered layer-2 parameters (tiny [B,H]/[B,1] gathers), padded rows
    # are masked out in-kernel so their values are irrelevant.
    w2_sel = pad_rows(jnp.take(w2.T, items_ids, axis=0).astype(jnp.float32))      # [B_pad, H]
    b2_sel = pad_rows(jnp.take(b2[0], items_ids, axis=0)[:, None]
                      .astype(jnp.float32))                                       # [B_pad, 1]

    w1_bf = w1.astype(jnp.bfloat16)                    # resident MXU operand
    b1_f = b1.astype(jnp.float32).reshape(1, H)

    kernel = functools.partial(_lxr_loss_kernel, block_b=int(block_b),
                               valid_rows=int(B))

    out = pl.pallas_call(
        kernel,
        out_shape=jax.ShapeDtypeStruct((grid_b * 8, 128), jnp.float32),
        grid_spec=pltpu.PrefetchScalarGridSpec(
            num_scalar_prefetch=0,
            grid=(grid_b,),
            in_specs=[
                pl.BlockSpec((block_b, N), lambda i: (i, 0)),   # user tile (bf16)
                pl.BlockSpec((block_b, N), lambda i: (i, 0)),   # pos_mask tile (bf16)
                pl.BlockSpec((block_b, H), lambda i: (i, 0)),   # gathered W2 cols
                pl.BlockSpec((block_b, 1), lambda i: (i, 0)),   # gathered b2
                pl.BlockSpec((N, H), lambda i: (0, 0)),         # W1 (resident, bf16)
                pl.BlockSpec((1, H), lambda i: (0, 0)),         # b1 (resident)
            ],
            out_specs=pl.BlockSpec((8, 128), lambda i: (i, 0)),  # per-tile partials
        ),
        compiler_params=pltpu.CompilerParams(
            # Batch axis is fully independent now (no carried accumulator), so it
            # can be sharded across TensorCores on v7x.
            dimension_semantics=("parallel",),
            vmem_limit_bytes=48 * 1024 * 1024,
        ),
    )(user_p, mask_p, w2_sel, b2_sel, w1_bf, b1_f)

    # Final tiny reduction + divides in plain JAX (num_tiles x 4 values).
    parts = out.reshape(grid_b, 8, 128)[:, :4, 0]      # [num_tiles, 4]
    sums = jnp.sum(parts, axis=0)                       # [4]
    inv_b = 1.0 / float(B)
    pos_loss = -sums[0] * inv_b
    neg_loss = sums[1] * inv_b
    # guard: an all-empty batch would divide by zero (original produces NaN).
    l1 = sums[2] / jnp.maximum(sums[3], jnp.float32(1e-12))
    combined = lambda_pos * pos_loss + lambda_neg * neg_loss + alpha * l1
    return combined, pos_loss, neg_loss, l1


def _reference(user, onehot, pos_mask, w1, b1, w2, b2, lp, ln, a):
    """Spec-faithful f32 reference: full recommender, full sigmoid, one-hot gather, log."""
    neg_mask = 1.0 - pos_mask
    xp = user * pos_mask
    xn = user * neg_mask

    def rec(x):
        h = jnp.tanh(x @ w1 + b1)
        return jax.nn.sigmoid(h @ w2 + b2)

    rp = jnp.sum(rec(xp) * onehot, axis=-1)
    rn = jnp.sum(rec(xn) * onehot, axis=-1)
    pos_loss = -jnp.mean(jnp.log(rp))
    neg_loss = jnp.mean(jnp.log(rn))
    sel = (user > 0).astype(jnp.float32)
    l1 = jnp.sum(xp * sel) / jnp.sum(sel)
    return lp * pos_loss + ln * neg_loss + a * l1, pos_loss, neg_loss, l1


if __name__ == "__main__":
    # Small shapes.  B=20 is deliberately not a tile multiple: the default run
    # exercises the zero-padded tail masking, and the block_b=16 run exercises
    # the multi-step (parallel) batch grid as well.
    B, N, H = 20, 256, 128
    lambda_pos, lambda_neg, alpha = 1.0, 1.0, 0.1

    key = jax.random.PRNGKey(0)
    k_user, k_mask, k_ids, k_w1, k_b1, k_w2, k_b2 = jax.random.split(key, 7)

    # binary user histories, [0,1] positive masks, per-row target item ids
    user_tensors = jax.random.bernoulli(k_user, 0.3, (B, N)).astype(jnp.float32)
    pos_masks = jax.random.uniform(k_mask, (B, N), dtype=jnp.float32)
    items_ids = jax.random.randint(k_ids, (B,), 0, N)
    items_tensors = jax.nn.one_hot(items_ids, N, dtype=jnp.float32)

    # deterministic synthetic frozen recommender (replaces the checkpoint load)
    w1 = 0.05 * jax.random.normal(k_w1, (N, H), dtype=jnp.float32)
    b1 = 0.05 * jax.random.normal(k_b1, (1, H), dtype=jnp.float32)
    w2 = 0.05 * jax.random.normal(k_w2, (H, N), dtype=jnp.float32)
    b2 = 0.05 * jax.random.normal(k_b2, (1, N), dtype=jnp.float32)

    ref = _reference(user_tensors, items_tensors, pos_masks,
                     w1, b1, w2, b2, lambda_pos, lambda_neg, alpha)

    # bf16 streaming / bf16 MXU operands introduce ~1e-3 relative error vs the
    # f32 reference, hence the relaxed tolerance.
    for bb in (None, 16):
        got = lxr_loss(user_tensors, items_tensors, items_ids, pos_masks,
                       w1, b1, w2, b2,
                       lambda_pos=lambda_pos, lambda_neg=lambda_neg, alpha=alpha,
                       block_b=bb)
        jax.block_until_ready(got)
        for g, w in zip(got, ref):
            assert jnp.allclose(g, w, rtol=2e-2, atol=2e-2), (bb, g, w)

    print("KERNEL_OK")
</pallas_src>

<mosaic_0001>
module attributes {stable_mosaic.version = 11 : i64} {
  func.func @_lxr_loss_kernel(%arg0: i32, %arg1: memref<32x256xbf16, #tpu.memory_space<vmem>>, %arg2: memref<32x256xbf16, #tpu.memory_space<vmem>>, %arg3: memref<32x128xf32, #tpu.memory_space<vmem>>, %arg4: memref<32x1xf32, #tpu.memory_space<vmem>>, %arg5: memref<256x128xbf16, #tpu.memory_space<vmem>>, %arg6: memref<1x128xf32, #tpu.memory_space<vmem>>, %arg7: memref<8x128xf32, #tpu.memory_space<vmem>>) attributes {dimension_semantics = [#tpu.dimension_semantics<parallel>], iteration_bounds = array<i64: 1>, scalar_prefetch = 0 : i64, scratch_operands = 0 : i64, tpu.core_type = #tpu.core_type<tc>, window_params = [{transform_indices = @transform_0, window_bounds = array<i64: 32, 256>}, {transform_indices = @transform_1, window_bounds = array<i64: 32, 256>}, {transform_indices = @transform_2, window_bounds = array<i64: 32, 128>}, {transform_indices = @transform_3, window_bounds = array<i64: 32, 1>}, {pipeline_mode = #tpu.pipeline_mode<synchronous>, transform_indices = @transform_4, window_bounds = array<i64: 256, 128>}, {pipeline_mode = #tpu.pipeline_mode<synchronous>, transform_indices = @transform_5, window_bounds = array<i64: 1, 128>}, {transform_indices = @transform_6, window_bounds = array<i64: 8, 128>}]} {
    %c0 = arith.constant 0 : index
    %c0_0 = arith.constant 0 : index
    %0 = vector.load %arg1[%c0, %c0_0] : memref<32x256xbf16, #tpu.memory_space<vmem>>, vector<32x256xbf16>
    %c0_1 = arith.constant 0 : index
    %c0_2 = arith.constant 0 : index
    %1 = vector.load %arg2[%c0_1, %c0_2] : memref<32x256xbf16, #tpu.memory_space<vmem>>, vector<32x256xbf16>
    %2 = arith.extf %0 : vector<32x256xbf16> to vector<32x256xf32>
    %3 = arith.extf %1 : vector<32x256xbf16> to vector<32x256xf32>
    %4 = arith.mulf %2, %3 : vector<32x256xf32>
    %5 = arith.truncf %4 : vector<32x256xf32> to vector<32x256xbf16>
    %c0_3 = arith.constant 0 : index
    %c0_4 = arith.constant 0 : index
    %6 = vector.load %arg5[%c0_3, %c0_4] : memref<256x128xbf16, #tpu.memory_space<vmem>>, vector<256x128xbf16>
    %c0_5 = arith.constant 0 : index
    %c0_6 = arith.constant 0 : index
    %7 = vector.load %arg6[%c0_5, %c0_6] : memref<1x128xf32, #tpu.memory_space<vmem>>, vector<1x128xf32>
    %cst = arith.constant dense<0.000000e+00> : vector<32x128xf32>
    %8 = tpu.matmul %5, %6, %cst {dimension_numbers = #tpu.dot_dimension_numbers<[1], [0], [0], [1], [0, 0, 1, 1], [], []>} : vector<32x256xbf16>, vector<256x128xbf16>, vector<32x128xf32> -> vector<32x128xf32>
    %cst_7 = arith.constant dense<0.000000e+00> : vector<32x128xf32>
    %9 = tpu.matmul %0, %6, %cst_7 {dimension_numbers = #tpu.dot_dimension_numbers<[1], [0], [0], [1], [0, 0, 1, 1], [], []>} : vector<32x256xbf16>, vector<256x128xbf16>, vector<32x128xf32> -> vector<32x128xf32>
    %10 = vector.broadcast %7 : vector<1x128xf32> to vector<32x128xf32>
    %11 = arith.addf %8, %10 : vector<32x128xf32>
    %12 = math.tanh %11 : vector<32x128xf32>
    %13 = arith.subf %9, %8 : vector<32x128xf32>
    %14 = vector.broadcast %7 : vector<1x128xf32> to vector<32x128xf32>
    %15 = arith.addf %13, %14 : vector<32x128xf32>
    %16 = math.tanh %15 : vector<32x128xf32>
    %c0_8 = arith.constant 0 : index
    %c0_9 = arith.constant 0 : index
    %17 = vector.load %arg3[%c0_8, %c0_9] : memref<32x128xf32, #tpu.memory_space<vmem>>, vector<32x128xf32>
    %c0_10 = arith.constant 0 : index
    %c0_11 = arith.constant 0 : index
    %18 = vector.load %arg4[%c0_10, %c0_11] : memref<32x1xf32, #tpu.memory_space<vmem>>, vector<32x1xf32>
    %19 = arith.mulf %12, %17 : vector<32x128xf32>
    %cst_12 = arith.constant dense<0.000000e+00> : vector<32xf32>
    %20 = vector.multi_reduction <add>, %19, %cst_12 [1] : vector<32x128xf32> to vector<32xf32>
    %21 = vector.shape_cast %20 : vector<32xf32> to vector<32x1xf32>
    %22 = arith.addf %21, %18 : vector<32x1xf32>
    %23 = arith.mulf %16, %17 : vector<32x128xf32>
    %cst_13 = arith.constant dense<0.000000e+00> : vector<32xf32>
    %24 = vector.multi_reduction <add>, %23, %cst_13 [1] : vector<32x128xf32> to vector<32xf32>
    %25 = vector.shape_cast %24 : vector<32xf32> to vector<32x1xf32>
    %26 = arith.addf %25, %18 : vector<32x1xf32>
    %27 = tpu.iota {dimensions = array<i32: 0>} : vector<32x1xi32>
    %c32_i32 = arith.constant 32 : i32
    %28 = arith.muli %arg0, %c32_i32 : i32
    %29 = vector.broadcast %28 : i32 to vector<32x1xi32>
    %30 = arith.addi %27, %29 : vector<32x1xi32>
    %c20_i32 = arith.constant 20 : i32
    %31 = vector.broadcast %c20_i32 : i32 to vector<32x1xi32>
    %32 = arith.cmpi slt, %30, %31 : vector<32x1xi32>
    %33 = arith.extui %32 : vector<32x1xi1> to vector<32x1xi32>
    %34 = arith.sitofp %33 : vector<32x1xi32> to vector<32x1xf32>
    %cst_14 = arith.constant 0.000000e+00 : f32
    %35 = vector.broadcast %cst_14 : f32 to vector<32x1xf32>
    %36 = arith.minimumf %22, %35 : vector<32x1xf32>
    %37 = math.absf %22 : vector<32x1xf32>
    %cst_15 = arith.constant 0.000000e+00 : f32
    %38 = vector.broadcast %cst_15 : f32 to vector<32x1xf32>
    %39 = arith.subf %38, %37 : vector<32x1xf32>
    %40 = math.exp %39 : vector<32x1xf32>
    %41 = math.log1p %40 : vector<32x1xf32>
    %42 = arith.subf %36, %41 : vector<32x1xf32>
    %43 = arith.mulf %42, %34 : vector<32x1xf32>
    %44 = vector.shape_cast %43 : vector<32x1xf32> to vector<1x32x1xf32>
    %cst_16 = arith.constant dense<0.000000e+00> : vector<1xf32>
    %45 = vector.multi_reduction <add>, %44, %cst_16 [1, 2] : vector<1x32x1xf32> to vector<1xf32>
    %46 = vector.shape_cast %45 : vector<1xf32> to vector<1x1x1xf32>
    %47 = vector.extract %46[0, 0, 0] : f32 from vector<1x1x1xf32>
    %cst_17 = arith.constant 0.000000e+00 : f32
    %48 = vector.broadcast %cst_17 : f32 to vector<32x1xf32>
    %49 = arith.minimumf %26, %48 : vector<32x1xf32>
    %50 = math.absf %26 : vector<32x1xf32>
    %cst_18 = arith.constant 0.000000e+00 : f32
    %51 = vector.broadcast %cst_18 : f32 to vector<32x1xf32>
    %52 = arith.subf %51, %50 : vector<32x1xf32>
    %53 = math.exp %52 : vector<32x1xf32>
    %54 = math.log1p %53 : vector<32x1xf32>
    %55 = arith.subf %49, %54 : vector<32x1xf32>
    %56 = arith.mulf %55, %34 : vector<32x1xf32>
    %57 = vector.shape_cast %56 : vector<32x1xf32> to vector<1x32x1xf32>
    %cst_19 = arith.constant dense<0.000000e+00> : vector<1xf32>
    %58 = vector.multi_reduction <add>, %57, %cst_19 [1, 2] : vector<1x32x1xf32> to vector<1xf32>
    %59 = vector.shape_cast %58 : vector<1xf32> to vector<1x1x1xf32>
    %60 = vector.extract %59[0, 0, 0] : f32 from vector<1x1x1xf32>
    %cst_20 = arith.constant 0.000000e+00 : f32
    %61 = vector.broadcast %cst_20 : f32 to vector<32x256xf32>
    %62 = arith.cmpf ogt, %2, %61 : vector<32x256xf32>
    %63 = arith.extui %62 : vector<32x256xi1> to vector<32x256xi32>
    %64 = arith.sitofp %63 : vector<32x256xi32> to vector<32x256xf32>
    %65 = arith.mulf %4, %64 : vector<32x256xf32>
    %66 = vector.shape_cast %65 : vector<32x256xf32> to vector<1x32x256xf32>
    %cst_21 = arith.constant dense<0.000000e+00> : vector<1xf32>
    %67 = vector.multi_reduction <add>, %66, %cst_21 [1, 2] : vector<1x32x256xf32> to vector<1xf32>
    %68 = vector.shape_cast %67 : vector<1xf32> to vector<1x1x1xf32>
    %69 = vector.extract %68[0, 0, 0] : f32 from vector<1x1x1xf32>
    %70 = vector.shape_cast %64 : vector<32x256xf32> to vector<1x32x256xf32>
    %cst_22 = arith.constant dense<0.000000e+00> : vector<1xf32>
    %71 = vector.multi_reduction <add>, %70, %cst_22 [1, 2] : vector<1x32x256xf32> to vector<1xf32>
    %72 = vector.shape_cast %71 : vector<1xf32> to vector<1x1x1xf32>
    %73 = vector.extract %72[0, 0, 0] : f32 from vector<1x1x1xf32>
    %74 = tpu.iota {dimensions = array<i32: 0>} : vector<8x128xi32>
    %c0_i32 = arith.constant 0 : i32
    %75 = vector.broadcast %c0_i32 : i32 to vector<8x128xi32>
    %76 = arith.cmpi eq, %74, %75 : vector<8x128xi32>
    %cst_23 = arith.constant 0.000000e+00 : f32
    %77 = vector.broadcast %47 : f32 to vector<8x128xf32>
    %78 = vector.broadcast %cst_23 : f32 to vector<8x128xf32>
    %79 = arith.select %76, %77, %78 : vector<8x128xi1>, vector<8x128xf32>
    %c1_i32 = arith.constant 1 : i32
    %80 = vector.broadcast %c1_i32 : i32 to vector<8x128xi32>
    %81 = arith.cmpi eq, %74, %80 : vector<8x128xi32>
    %cst_24 = arith.constant 0.000000e+00 : f32
    %82 = vector.broadcast %60 : f32 to vector<8x128xf32>
    %83 = vector.broadcast %cst_24 : f32 to vector<8x128xf32>
    %84 = arith.select %81, %82, %83 : vector<8x128xi1>, vector<8x128xf32>
    %85 = arith.addf %79, %84 : vector<8x128xf32>
    %c2_i32 = arith.constant 2 : i32
    %86 = vector.broadcast %c2_i32 : i32 to vector<8x128xi32>
    %87 = arith.cmpi eq, %74, %86 : vector<8x128xi32>
    %cst_25 = arith.constant 0.000000e+00 : f32
    %88 = vector.broadcast %69 : f32 to vector<8x128xf32>
    %89 = vector.broadcast %cst_25 : f32 to vector<8x128xf32>
    %90 = arith.select %87, %88, %89 : vector<8x128xi1>, vector<8x128xf32>
    %91 = arith.addf %85, %90 : vector<8x128xf32>
    %c3_i32 = arith.constant 3 : i32
    %92 = vector.broadcast %c3_i32 : i32 to vector<8x128xi32>
    %93 = arith.cmpi eq, %74, %92 : vector<8x128xi32>
    %cst_26 = arith.constant 0.000000e+00 : f32
    %94 = vector.broadcast %73 : f32 to vector<8x128xf32>
    %95 = vector.broadcast %cst_26 : f32 to vector<8x128xf32>
    %96 = arith.select %93, %94, %95 : vector<8x128xi1>, vector<8x128xf32>
    %97 = arith.addf %91, %96 : vector<8x128xf32>
    %c0_27 = arith.constant 0 : index
    %c0_28 = arith.constant 0 : index
    %98 = vector.load %arg7[%c0_27, %c0_28] : memref<8x128xf32, #tpu.memory_space<vmem>>, vector<8x128xf32>
    tpu.vector_store %arg7[%c0_27, %c0_28], %97 {strides = array<i32>} : memref<8x128xf32, #tpu.memory_space<vmem>>, vector<8x128xf32>,
    return
  }
  func.func @transform_0(%arg0: i32) -> (i32, i32) {
    %c0_i32 = arith.constant 0 : i32
    %c0_i32_0 = arith.constant 0 : i32
    return %arg0, %c0_i32 : i32, i32
  }
  func.func @transform_1(%arg0: i32) -> (i32, i32) {
    %c0_i32 = arith.constant 0 : i32
    %c0_i32_0 = arith.constant 0 : i32
    return %arg0, %c0_i32 : i32, i32
  }
  func.func @transform_2(%arg0: i32) -> (i32, i32) {
    %c0_i32 = arith.constant 0 : i32
    %c0_i32_0 = arith.constant 0 : i32
    return %arg0, %c0_i32 : i32, i32
  }
  func.func @transform_3(%arg0: i32) -> (i32, i32) {
    %c0_i32 = arith.constant 0 : i32
    %c0_i32_0 = arith.constant 0 : i32
    return %arg0, %c0_i32 : i32, i32
  }
  func.func @transform_4(%arg0: i32) -> (i32, i32) {
    %c0_i32 = arith.constant 0 : i32
    %c0_i32_0 = arith.constant 0 : i32
    %c0_i32_1 = arith.constant 0 : i32
    return %c0_i32, %c0_i32_0 : i32, i32
  }
  func.func @transform_5(%arg0: i32) -> (i32, i32) {
    %c0_i32 = arith.constant 0 : i32
    %c0_i32_0 = arith.constant 0 : i32
    %c0_i32_1 = arith.constant 0 : i32
    return %c0_i32, %c0_i32_0 : i32, i32
  }
  func.func @transform_6(%arg0: i32) -> (i32, i32) {
    %c0_i32 = arith.constant 0 : i32
    %c0_i32_0 = arith.constant 0 : i32
    return %arg0, %c0_i32 : i32, i32
  }
}

</mosaic_0001>

<llo_original>
// kernel: tpu_custom_call.1
$region0: #{tpu_custom_call.1}
  #allocation0 [shape = 'u32[]', space=smem, size = 0x4, offset = 0x4, fixed_abs, tag = 'smem constant byte address 0x4 - core index']
  #allocation1 [shape = 'u32[72,128]{1,0:T(1,128)}', space=vmem, size = 0x9000, scoped, tag = 'internal scratch']
  %s0 = inlined_call_operand.vmem [shape: bf16[32,256], index: 0, kind: input, shape index: {}]
  %s1 = inlined_call_operand.hbm [shape: bf16[32,256], index: 1, kind: input, shape index: {}]
  %s2 = inlined_call_operand.hbm [shape: f32[32,128], index: 2, kind: input, shape index: {}]
  %s3 = inlined_call_operand.vmem [shape: f32[32,1], index: 3, kind: input, shape index: {}]
  %s4 = inlined_call_operand.hbm [shape: bf16[256,128], index: 4, kind: input, shape index: {}]
  %s5 = inlined_call_operand.vmem [shape: f32[1,128], index: 5, kind: input, shape index: {}]
  %s6 = inlined_call_operand.hbm [shape: f32[8,128], index: 6, kind: output, shape index: {}]
  %s7 = sld [smem:[#allocation0]]
  $region46: #{tpu_custom_call.1} parent=0
    _
  %s9 = ssub.s32 1, %s7
  %s10 = scalar_select 0, %s9, %s7
  $region1: #{tpu_custom_call.1} parent=0
    #allocation2 [shape = 'u8[16384]{0}', space=vmem, size = 0x4000, scoped, tag = 'input window, operand 1, single buffered']
    #allocation3 [shape = 's32[1]{0}', space=sflag, size = 0x4, scoped, tag = 'scoped memory for tpu_custom_call.1']
    #allocation4 [shape = 's32[1]{0}', space=sflag, size = 0x4, scoped, tag = 'scoped memory for tpu_custom_call.1']
    #allocation5 [shape = 'u8[16384]{0}', space=vmem, size = 0x4000, scoped, tag = 'input window, operand 2, single buffered']
    #allocation6 [shape = 's32[1]{0}', space=sflag, size = 0x4, scoped, tag = 'scoped memory for tpu_custom_call.1']
    #allocation7 [shape = 'u8[65536]{0}', space=vmem, size = 0x10000, scoped, tag = 'input window, operand 4, single buffered']
    #allocation8 [shape = 'u8[4096]{0}', space=vmem, size = 0x1000, scoped, tag = 'output window, operand 0, single buffered']
    %11 = vsyncpa [#allocation3], 0
    %12 = vsyncpa [#allocation6], 0
    %13 = vsyncpa [#allocation4], 0
    // Predicated region
    $region2: #{tpu_custom_call.1} parent=1 // pred_check
      _
    $region3: #{tpu_custom_call.1} parent=1 // pred_check_branch
      %15 = sbr.rel (0) target = $region5
    $region4: #{tpu_custom_call.1} parent=1 // pred_region
      _
    $region5: #{tpu_custom_call.1} parent=1 // pred_fallthru
      _
    // Predicated region
    $region6: #{tpu_custom_call.1} parent=1 // pred_check
      _
    $region7: #{tpu_custom_call.1} parent=1 // pred_check_branch
      %17 = sbr.rel (0) target = $region9
    $region8: #{tpu_custom_call.1} parent=1 // pred_region
      %19 = vsyncadd [#allocation3], 0
      %s20 = sshll.u32 %s1, 4
      %s21 = int_to_ptr.hbm [resolvable:$true] %s20
      %s22 = sshll.u32 [#allocation2], 4
      %s23 = int_to_ptr.vmem [resolvable:$true] %s22
      %28 = dma.hbm_to_vmem [thread:$0]  %s21, 512, %s23, [#allocation3], 128, 128, 8
    $region9: #{tpu_custom_call.1} parent=1 // pred_fallthru
      _
    // Predicated region
    $region10: #{tpu_custom_call.1} parent=1 // pred_check
      _
    $region11: #{tpu_custom_call.1} parent=1 // pred_check_branch
      %30 = sbr.rel (0) target = $region13
    $region12: #{tpu_custom_call.1} parent=1 // pred_region
      %32 = vsyncadd [#allocation6], 0
      %s33 = sshll.u32 %s2, 4
      %s34 = int_to_ptr.hbm [resolvable:$true] %s33
      %s35 = sshll.u32 [#allocation5], 4
      %s36 = int_to_ptr.vmem [resolvable:$true] %s35
      %41 = dma.hbm_to_vmem [thread:$0]  %s34, 512, %s36, [#allocation6], 128, 128, 8
    $region13: #{tpu_custom_call.1} parent=1 // pred_fallthru
      _
    // Predicated region
    $region14: #{tpu_custom_call.1} parent=1 // pred_check
      _
    $region15: #{tpu_custom_call.1} parent=1 // pred_check_branch
      %43 = sbr.rel (0) target = $region17
    $region16: #{tpu_custom_call.1} parent=1 // pred_region
      _
    $region17: #{tpu_custom_call.1} parent=1 // pred_fallthru
      _
    // Predicated region
    $region18: #{tpu_custom_call.1} parent=1 // pred_check
      _
    $region19: #{tpu_custom_call.1} parent=1 // pred_check_branch
      %45 = sbr.rel (0) target = $region21
    $region20: #{tpu_custom_call.1} parent=1 // pred_region
      %47 = vsyncadd [#allocation6], 0
      %s48 = sshll.u32 %s4, 4
      %s49 = int_to_ptr.hbm [resolvable:$true] %s48
      %s50 = sshll.u32 [#allocation7], 4
      %s51 = int_to_ptr.vmem [resolvable:$true] %s50
      %56 = dma.hbm_to_vmem [thread:$0]  %s49, 2048, %s51, [#allocation6], 64, 64, 4
    $region21: #{tpu_custom_call.1} parent=1 // pred_fallthru
      _
    // Predicated region
    $region22: #{tpu_custom_call.1} parent=1 // pred_check
      _
    $region23: #{tpu_custom_call.1} parent=1 // pred_check_branch
      %58 = sbr.rel (0) target = $region25
    $region24: #{tpu_custom_call.1} parent=1 // pred_region
      _
    $region25: #{tpu_custom_call.1} parent=1 // pred_fallthru
      _
    // Predicated region
    $region26: #{tpu_custom_call.1} parent=1 // pred_check
      _
    $region27: #{tpu_custom_call.1} parent=1 // pred_check_branch
      %60 = sbr.rel (0) target = $region29
    $region28: #{tpu_custom_call.1} parent=1 // pred_region
      %62 = dma.done [#allocation3], 512
    $region29: #{tpu_custom_call.1} parent=1 // pred_fallthru
      _
    // Predicated region
    $region30: #{tpu_custom_call.1} parent=1 // pred_check
      _
    $region31: #{tpu_custom_call.1} parent=1 // pred_check_branch
      %64 = sbr.rel (0) target = $region33
    $region32: #{tpu_custom_call.1} parent=1 // pred_region
      %66 = dma.done [#allocation6], 512
    $region33: #{tpu_custom_call.1} parent=1 // pred_fallthru
      _
    // Predicated region
    $region34: #{tpu_custom_call.1} parent=1 // pred_check
      _
    $region35: #{tpu_custom_call.1} parent=1 // pred_check_branch
      %68 = sbr.rel (0) target = $region37
    $region36: #{tpu_custom_call.1} parent=1 // pred_region
      %70 = dma.done [#allocation6], 2048
    $region37: #{tpu_custom_call.1} parent=1 // pred_fallthru
      _
    %v71 = vld [vmem:[%s0] sm:$0xff]
    %v72 = vld [vmem:[%s0 + $0x8] sm:$0xff]
    %v73 = vld [vmem:[%s0 + $0x10] sm:$0xff]
    %v74 = vld [vmem:[%s0 + $0x18] sm:$0xff]
    %v75 = vld [vmem:[#allocation2] sm:$0xff]
    %v76 = vld [vmem:[#allocation2 + $0x8] sm:$0xff]
    %v77 = vld [vmem:[#allocation2 + $0x10] sm:$0xff]
    %v78 = vld [vmem:[#allocation2 + $0x18] sm:$0xff]
    %v79 = vunpack.c.l.bf16 %v71
    %v80 = vunpack.c.h.bf16 %v71
    %v81 = vunpack.c.l.bf16 %v72
    %v82 = vunpack.c.h.bf16 %v72
    %v83 = vunpack.c.l.bf16 %v73
    %v84 = vunpack.c.h.bf16 %v73
    %v85 = vunpack.c.l.bf16 %v74
    %v86 = vunpack.c.h.bf16 %v74
    %v87 = vunpack.c.l.bf16 %v75
    %v88 = vunpack.c.h.bf16 %v75
    %v89 = vunpack.c.l.bf16 %v76
    %v90 = vunpack.c.h.bf16 %v76
    %v91 = vunpack.c.l.bf16 %v77
    %v92 = vunpack.c.h.bf16 %v77
    %v93 = vunpack.c.l.bf16 %v78
    %v94 = vunpack.c.h.bf16 %v78
    %v95 = vmul.f32 %v79, %v87
    %v96 = vmul.f32 %v80, %v88
    %v97 = vmul.f32 %v81, %v89
    %v98 = vmul.f32 %v82, %v90
    %v99 = vmul.f32 %v83, %v91
    %v100 = vmul.f32 %v84, %v92
    %v101 = vmul.f32 %v85, %v93
    %v102 = vmul.f32 %v86, %v94
    %v103 = vpack.c.bf16 %v97, %v95
    %v104 = vpack.c.bf16 %v98, %v96
    %v105 = vpack.c.bf16 %v101, %v99
    %v106 = vpack.c.bf16 %v102, %v100
    %v107 = vld [vmem:[#allocation7] sm:$0xf]
    %v108 = vld [vmem:[#allocation7 + $0x4] sm:$0xf]
    %v109 = vld [vmem:[#allocation7 + $0x8] sm:$0xf]
    %v110 = vld [vmem:[#allocation7 + $0xc] sm:$0xf]
    %v111 = vld [vmem:[#allocation7 + $0x10] sm:$0xf]
    %v112 = vld [vmem:[#allocation7 + $0x14] sm:$0xf]
    %v113 = vld [vmem:[#allocation7 + $0x18] sm:$0xf]
    %v114 = vld [vmem:[#allocation7 + $0x1c] sm:$0xf]
    %v115 = vld [vmem:[#allocation7 + $0x20] sm:$0xf]
    %v116 = vld [vmem:[#allocation7 + $0x24] sm:$0xf]
    %v117 = vld [vmem:[#allocation7 + $0x28] sm:$0xf]
    %v118 = vld [vmem:[#allocation7 + $0x2c] sm:$0xf]
    %v119 = vld [vmem:[#allocation7 + $0x30] sm:$0xf]
    %v120 = vld [vmem:[#allocation7 + $0x34] sm:$0xf]
    %v121 = vld [vmem:[#allocation7 + $0x38] sm:$0xf]
    %v122 = vld [vmem:[#allocation7 + $0x3c] sm:$0xf]
    %v123 = vld [vmem:[#allocation7 + $0x40] sm:$0xf]
    %v124 = vld [vmem:[#allocation7 + $0x44] sm:$0xf]
    %v125 = vld [vmem:[#allocation7 + $0x48] sm:$0xf]
    %v126 = vld [vmem:[#allocation7 + $0x4c] sm:$0xf]
    %v127 = vld [vmem:[#allocation7 + $0x50] sm:$0xf]
    %v128 = vld [vmem:[#allocation7 + $0x54] sm:$0xf]
    %v129 = vld [vmem:[#allocation7 + $0x58] sm:$0xf]
    %v130 = vld [vmem:[#allocation7 + $0x5c] sm:$0xf]
    %v131 = vld [vmem:[#allocation7 + $0x60] sm:$0xf]
    %v132 = vld [vmem:[#allocation7 + $0x64] sm:$0xf]
    %v133 = vld [vmem:[#allocation7 + $0x68] sm:$0xf]
    %v134 = vld [vmem:[#allocation7 + $0x6c] sm:$0xf]
    %v135 = vld [vmem:[#allocation7 + $0x70] sm:$0xf]
    %v136 = vld [vmem:[#allocation7 + $0x74] sm:$0xf]
    %v137 = vld [vmem:[#allocation7 + $0x78] sm:$0xf]
    %v138 = vld [vmem:[#allocation7 + $0x7c] sm:$0xf]
    %v139 = vld [vmem:[%s5] sm:$0x1]
    %v172 = vunpack.c.l.b16 %v107
    %v173 = vunpack.c.l.b16 %v108
    %v174 = vunpack.c.l.b16 %v109
    %v175 = vunpack.c.l.b16 %v110
    %v176 = vunpack.c.l.b16 %v111
    %v177 = vunpack.c.l.b16 %v112
    %v178 = vunpack.c.l.b16 %v113
    %v179 = vunpack.c.l.b16 %v114
    %v180 = vunpack.c.l.b16 %v115
    %v181 = vunpack.c.l.b16 %v116
    %v182 = vunpack.c.l.b16 %v117
    %v183 = vunpack.c.l.b16 %v118
    %v184 = vunpack.c.l.b16 %v119
    %v185 = vunpack.c.l.b16 %v120
    %v186 = vunpack.c.l.b16 %v121
    %v187 = vunpack.c.l.b16 %v122
    %v188 = vunpack.c.l.b16 %v123
    %v189 = vunpack.c.l.b16 %v124
    %v190 = vunpack.c.l.b16 %v125
    %v191 = vunpack.c.l.b16 %v126
    %v192 = vunpack.c.l.b16 %v127
    %v193 = vunpack.c.l.b16 %v128
    %v194 = vunpack.c.l.b16 %v129
    %v195 = vunpack.c.l.b16 %v130
    %v196 = vunpack.c.l.b16 %v131
    %v197 = vunpack.c.l.b16 %v132
    %v198 = vunpack.c.l.b16 %v133
    %v199 = vunpack.c.l.b16 %v134
    %v200 = vunpack.c.l.b16 %v135
    %v201 = vunpack.c.l.b16 %v136
    %v202 = vunpack.c.l.b16 %v137
    %v203 = vunpack.c.l.b16 %v138
    %v204 = vpack.c.b16 %v173, %v172
    %v205 = vpack.c.b16 %v175, %v174
    %v206 = vpack.c.b16 %v177, %v176
    %v207 = vpack.c.b16 %v179, %v178
    %v208 = vpack.c.b16 %v181, %v180
    %v209 = vpack.c.b16 %v183, %v182
    %v210 = vpack.c.b16 %v185, %v184
    %v211 = vpack.c.b16 %v187, %v186
    %v212 = vpack.c.b16 %v189, %v188
    %v213 = vpack.c.b16 %v191, %v190
    %v214 = vpack.c.b16 %v193, %v192
    %v215 = vpack.c.b16 %v195, %v194
    %v216 = vpack.c.b16 %v197, %v196
    %v217 = vpack.c.b16 %v199, %v198
    %v218 = vpack.c.b16 %v201, %v200
    %v219 = vpack.c.b16 %v203, %v202
    %236 = vmatpush.bf16.msra.mxu0 %v211
    %237 = vmatpush.bf16.msra.mxu0 %v210
    %238 = vmatpush.bf16.msra.mxu0 %v209
    %239 = vmatpush.bf16.msra.mxu0 %v208
    %240 = vmatpush.bf16.msra.mxu0 %v207
    %241 = vmatpush.bf16.msra.mxu0 %v206
    %242 = vmatpush.bf16.msra.mxu0 %v205
    %243 = vmatpush.bf16.msra.mxu0 %v204
    %244 = vmatmul.bf16.gmra.mxu0 %v103
    %v245 = vpop.f32.mrf.mxu0
    %v246 = vadd.f32 0.0, %v245
    %v247 = vpop.f32.mrf.mxu0
    %v248 = vadd.f32 0.0, %v247
    %249 = vmatmul.bf16.gmra.mxu0 %v105
    %v250 = vpop.f32.mrf.mxu0
    %v251 = vadd.f32 0.0, %v250
    %v252 = vpop.f32.mrf.mxu0
    %v253 = vadd.f32 0.0, %v252
    %254 = vdwg.mxu0
    %255 = vmatpush.bf16.msra.mxu0 %v219
    %256 = vmatpush.bf16.msra.mxu0 %v218
    %257 = vmatpush.bf16.msra.mxu0 %v217
    %258 = vmatpush.bf16.msra.mxu0 %v216
    %259 = vmatpush.bf16.msra.mxu0 %v215
    %260 = vmatpush.bf16.msra.mxu0 %v214
    %261 = vmatpush.bf16.msra.mxu0 %v213
    %262 = vmatpush.bf16.msra.mxu0 %v212
    %263 = vmatmul.bf16.gmra.mxu0 %v104
    %v264 = vpop.f32.mrf.mxu0
    %v265 = vadd.f32 %v246, %v264
    %v266 = vpop.f32.mrf.mxu0
    %v267 = vadd.f32 %v248, %v266
    %268 = vmatmul.bf16.gmra.mxu0 %v106
    %v269 = vpop.f32.mrf.mxu0
    %v270 = vadd.f32 %v251, %v269
    %v271 = vpop.f32.mrf.mxu0
    %v272 = vadd.f32 %v253, %v271
    %273 = vdwg.mxu0
    %v278 = vunpack.c.l.b16 %v71
    %v279 = vunpack.c.h.b16 %v71
    %v280 = vunpack.c.l.b16 %v72
    %v281 = vunpack.c.h.b16 %v72
    %v282 = vunpack.c.l.b16 %v73
    %v283 = vunpack.c.h.b16 %v73
    %v284 = vunpack.c.l.b16 %v74
    %v285 = vunpack.c.h.b16 %v74
    %v286 = vpack.c.b16 %v280, %v278
    %v287 = vpack.c.b16 %v281, %v279
    %v288 = vpack.c.b16 %v284, %v282
    %v289 = vpack.c.b16 %v285, %v283
    %294 = vmatpush.bf16.msra.mxu0 %v211
    %295 = vmatpush.bf16.msra.mxu0 %v210
    %296 = vmatpush.bf16.msra.mxu0 %v209
    %297 = vmatpush.bf16.msra.mxu0 %v208
    %298 = vmatpush.bf16.msra.mxu0 %v207
    %299 = vmatpush.bf16.msra.mxu0 %v206
    %300 = vmatpush.bf16.msra.mxu0 %v205
    %301 = vmatpush.bf16.msra.mxu0 %v204
    %302 = vmatmul.bf16.gmra.mxu0 %v286
    %v303 = vpop.f32.mrf.mxu0
    %v304 = vadd.f32 0.0, %v303
    %v305 = vpop.f32.mrf.mxu0
    %v306 = vadd.f32 0.0, %v305
    %307 = vmatmul.bf16.gmra.mxu0 %v288
    %v308 = vpop.f32.mrf.mxu0
    %v309 = vadd.f32 0.0, %v308
    %v310 = vpop.f32.mrf.mxu0
    %v311 = vadd.f32 0.0, %v310
    %312 = vdwg.mxu0
    %313 = vmatpush.bf16.msra.mxu0 %v219
    %314 = vmatpush.bf16.msra.mxu0 %v218
    %315 = vmatpush.bf16.msra.mxu0 %v217
    %316 = vmatpush.bf16.msra.mxu0 %v216
    %317 = vmatpush.bf16.msra.mxu0 %v215
    %318 = vmatpush.bf16.msra.mxu0 %v214
    %319 = vmatpush.bf16.msra.mxu0 %v213
    %320 = vmatpush.bf16.msra.mxu0 %v212
    %321 = vmatmul.bf16.gmra.mxu0 %v287
    %v322 = vpop.f32.mrf.mxu0
    %v323 = vadd.f32 %v304, %v322
    %v324 = vpop.f32.mrf.mxu0
    %v325 = vadd.f32 %v306, %v324
    %326 = vmatmul.bf16.gmra.mxu0 %v289
    %v327 = vpop.f32.mrf.mxu0
    %v328 = vadd.f32 %v309, %v327
    %v329 = vpop.f32.mrf.mxu0
    %v330 = vadd.f32 %v311, %v329
    %331 = vdwg.mxu0
    %v333 = vperm.slane %v139, 0
    %v335 = vadd.f32 %v265, %v333
    %v336 = vadd.f32 %v267, %v333
    %v337 = vadd.f32 %v270, %v333
    %v338 = vadd.f32 %v272, %v333
    %v339 = vtanh.pop %v335
    %v340 = vtanh.pop %v336
    %v341 = vtanh.pop %v337
    %v342 = vtanh.pop %v338
    %v343 = vsub.f32 %v323, %v265
    %v344 = vsub.f32 %v325, %v267
    %v345 = vsub.f32 %v328, %v270
    %v346 = vsub.f32 %v330, %v272
    %v347 = vadd.f32 %v343, %v333
    %v348 = vadd.f32 %v344, %v333
    %v349 = vadd.f32 %v345, %v333
    %v350 = vadd.f32 %v346, %v333
    %v351 = vtanh.pop %v347
    %v352 = vtanh.pop %v348
    %v353 = vtanh.pop %v349
    %v354 = vtanh.pop %v350
    %v355 = vld [vmem:[#allocation5] sm:$0xff]
    %v356 = vld [vmem:[#allocation5 + $0x8] sm:$0xff]
    %v357 = vld [vmem:[#allocation5 + $0x10] sm:$0xff]
    %v358 = vld [vmem:[#allocation5 + $0x18] sm:$0xff]
    %v359 = vld [vmem:[%s3] sm:$0xff]
    %v360 = vld [vmem:[%s3 + $0x8] sm:$0xff]
    %v361 = vld [vmem:[%s3 + $0x10] sm:$0xff]
    %v362 = vld [vmem:[%s3 + $0x18] sm:$0xff]
    %v363 = vmul.f32 %v339, %v355
    %v364 = vmul.f32 %v340, %v356
    %v365 = vmul.f32 %v341, %v357
    %v366 = vmul.f32 %v342, %v358
    %367 = vadd.xlane.f32.xlu0 %v363
    %v368 = vpop.xlane.xlu0 %367
    %369 = vadd.xlane.f32.xlu0 %v364
    %v370 = vpop.xlane.xlu0 %369
    %371 = vadd.xlane.f32.xlu0 %v365
    %v372 = vpop.xlane.xlu0 %371
    %373 = vadd.xlane.f32.xlu0 %v366
    %v374 = vpop.xlane.xlu0 %373
    %v375 = vadd.f32 %v368, %v359
    %v376 = vadd.f32 %v370, %v360
    %v377 = vadd.f32 %v372, %v361
    %v378 = vadd.f32 %v374, %v362
    %v379 = vmul.f32 %v351, %v355
    %v380 = vmul.f32 %v352, %v356
    %v381 = vmul.f32 %v353, %v357
    %v382 = vmul.f32 %v354, %v358
    %383 = vadd.xlane.f32.xlu0 %v379
    %v384 = vpop.xlane.xlu0 %383
    %385 = vadd.xlane.f32.xlu0 %v380
    %v386 = vpop.xlane.xlu0 %385
    %387 = vadd.xlane.f32.xlu0 %v381
    %v388 = vpop.xlane.xlu0 %387
    %389 = vadd.xlane.f32.xlu0 %v382
    %v390 = vpop.xlane.xlu0 %389
    %v391 = vadd.f32 %v384, %v359
    %v392 = vadd.f32 %v386, %v360
    %v393 = vadd.f32 %v388, %v361
    %v394 = vadd.f32 %v390, %v362
    %v395 = vlaneseq
    %v396 = vshrl.u32 %v395, 7
    %v397 = vadd.s32 %v396, 8
    %v398 = vadd.s32 %v396, 16
    %v399 = vadd.s32 %v396, 24
    %s400 = smul.u32 0, 32
    %v401 = vstv %s400
    %v402 = vadd.s32 %v396, %v401
    %v403 = vadd.s32 %v397, %v401
    %v404 = vadd.s32 %v398, %v401
    %v405 = vadd.s32 %v399, %v401
    %vm406 = vcmp.lt.s32.totalorder %v402, 20
    %vm407 = vcmp.lt.s32.totalorder %v403, 20
    %vm408 = vcmp.lt.s32.totalorder %v404, 20
    %vm409 = vcmp.lt.s32.totalorder %v405, 20
    %v410 = vsel %vm406, 1, 0
    %v411 = vsel %vm407, 1, 0
    %v412 = vsel %vm408, 1, 0
    %v413 = vsel %vm409, 1, 0
    %v414 = vcvt.s32.f32 %v410
    %v415 = vcvt.s32.f32 %v411
    %v416 = vcvt.s32.f32 %v412
    %v417 = vcvt.s32.f32 %v413
    %v418 = vmin.f32 %v375, 0.0
    %v419 = vmin.f32 %v376, 0.0
    %v420 = vmin.f32 %v377, 0.0
    %v421 = vmin.f32 %v378, 0.0
    %v422 = vand.u32 2147483647, %v375
    %v423 = vand.u32 2147483647, %v376
    %v424 = vand.u32 2147483647, %v377
    %v425 = vand.u32 2147483647, %v378
    %v426 = vsub.f32 0.0, %v422
    %v427 = vsub.f32 0.0, %v423
    %v428 = vsub.f32 0.0, %v424
    %v429 = vsub.f32 0.0, %v425
    %v430 = vmul.f32 %v426, 1.442695
    %v431 = vpow.pop %v430
    %v432 = vmul.f32 %v427, 1.442695
    %v433 = vpow.pop %v432
    %v434 = vmul.f32 %v428, 1.442695
    %v435 = vpow.pop %v434
    %v436 = vmul.f32 %v429, 1.442695
    %v437 = vpow.pop %v436
    %v438 = vadd.f32 %v431, 1.0
    %v439 = vlog2.pop %v438
    %v440 = vmul.f32 %v439, 0.6931472
    %v441 = vmul.f32 -0.5, %v431
    %v442 = vadd.f32 %v441, 1.0
    %v443 = vmul.f32 %v442, %v431
    %v444 = vand.u32 2147483647, %v431
    %vm445 = vcmp.lt.f32.partialorder %v444, 0.0004427343
    %v446 = vsel %vm445, %v443, %v440
    %v447 = vadd.f32 %v433, 1.0
    %v448 = vlog2.pop %v447
    %v449 = vmul.f32 %v448, 0.6931472
    %v450 = vmul.f32 -0.5, %v433
    %v451 = vadd.f32 %v450, 1.0
    %v452 = vmul.f32 %v451, %v433
    %v453 = vand.u32 2147483647, %v433
    %vm454 = vcmp.lt.f32.partialorder %v453, 0.0004427343
    %v455 = vsel %vm454, %v452, %v449
    %v456 = vadd.f32 %v435, 1.0
    %v457 = vlog2.pop %v456
    %v458 = vmul.f32 %v457, 0.6931472
    %v459 = vmul.f32 -0.5, %v435
    %v460 = vadd.f32 %v459, 1.0
    %v461 = vmul.f32 %v460, %v435
    %v462 = vand.u32 2147483647, %v435
    %vm463 = vcmp.lt.f32.partialorder %v462, 0.0004427343
    %v464 = vsel %vm463, %v461, %v458
    %v465 = vadd.f32 %v437, 1.0
    %v466 = vlog2.pop %v465
    %v467 = vmul.f32 %v466, 0.6931472
    %v468 = vmul.f32 -0.5, %v437
    %v469 = vadd.f32 %v468, 1.0
    %v470 = vmul.f32 %v469, %v437
    %v471 = vand.u32 2147483647, %v437
    %vm472 = vcmp.lt.f32.partialorder %v471, 0.0004427343
    %v473 = vsel %vm472, %v470, %v467
    %v474 = vsub.f32 %v418, %v446
    %v475 = vsub.f32 %v419, %v455
    %v476 = vsub.f32 %v420, %v464
    %v477 = vsub.f32 %v421, %v473
    %v478 = vmul.f32 %v474, %v414
    %v479 = vmul.f32 %v475, %v415
    %v480 = vmul.f32 %v476, %v416
    %v481 = vmul.f32 %v477, %v417
    %vm482 = vcmask 7168
    %v483 = vsel %vm482, %v478, 0.0
    %v484 = vsel %vm482, %v479, 0.0
    %v485 = vadd.f32 %v483, %v484
    %v486 = vsel %vm482, %v480, 0.0
    %v487 = vadd.f32 %v485, %v486
    %v488 = vsel %vm482, %v481, 0.0
    %v489 = vadd.f32 %v487, %v488
    %490 = vadd.xlane.f32.xlu0 %v489
    %v491 = vpop.xlane.xlu0 %490
    %v492 = vrot.slane %v491, 4
    %v493 = vadd.f32 %v491, %v492
    %v494 = vrot.slane %v493, 2
    %v495 = vadd.f32 %v493, %v494
    %v496 = vrot.slane %v495, 1
    %v497 = vadd.f32 %v495, %v496
    %s498 = vtos %v497
    %v499 = vmin.f32 %v391, 0.0
    %v500 = vmin.f32 %v392, 0.0
    %v501 = vmin.f32 %v393, 0.0
    %v502 = vmin.f32 %v394, 0.0
    %v503 = vand.u32 2147483647, %v391
    %v504 = vand.u32 2147483647, %v392
    %v505 = vand.u32 2147483647, %v393
    %v506 = vand.u32 2147483647, %v394
    %v507 = vsub.f32 0.0, %v503
    %v508 = vsub.f32 0.0, %v504
    %v509 = vsub.f32 0.0, %v505
    %v510 = vsub.f32 0.0, %v506
    %v511 = vmul.f32 %v507, 1.442695
    %v512 = vpow.pop %v511
    %v513 = vmul.f32 %v508, 1.442695
    %v514 = vpow.pop %v513
    %v515 = vmul.f32 %v509, 1.442695
    %v516 = vpow.pop %v515
    %v517 = vmul.f32 %v510, 1.442695
    %v518 = vpow.pop %v517
    %v519 = vadd.f32 %v512, 1.0
    %v520 = vlog2.pop %v519
    %v521 = vmul.f32 %v520, 0.6931472
    %v522 = vmul.f32 -0.5, %v512
    %v523 = vadd.f32 %v522, 1.0
    %v524 = vmul.f32 %v523, %v512
    %v525 = vand.u32 2147483647, %v512
    %vm526 = vcmp.lt.f32.partialorder %v525, 0.0004427343
    %v527 = vsel %vm526, %v524, %v521
    %v528 = vadd.f32 %v514, 1.0
    %v529 = vlog2.pop %v528
    %v530 = vmul.f32 %v529, 0.6931472
    %v531 = vmul.f32 -0.5, %v514
    %v532 = vadd.f32 %v531, 1.0
    %v533 = vmul.f32 %v532, %v514
    %v534 = vand.u32 2147483647, %v514
    %vm535 = vcmp.lt.f32.partialorder %v534, 0.0004427343
    %v536 = vsel %vm535, %v533, %v530
    %v537 = vadd.f32 %v516, 1.0
    %v538 = vlog2.pop %v537
    %v539 = vmul.f32 %v538, 0.6931472
    %v540 = vmul.f32 -0.5, %v516
    %v541 = vadd.f32 %v540, 1.0
    %v542 = vmul.f32 %v541, %v516
    %v543 = vand.u32 2147483647, %v516
    %vm544 = vcmp.lt.f32.partialorder %v543, 0.0004427343
    %v545 = vsel %vm544, %v542, %v539
    %v546 = vadd.f32 %v518, 1.0
    %v547 = vlog2.pop %v546
    %v548 = vmul.f32 %v547, 0.6931472
    %v549 = vmul.f32 -0.5, %v518
    %v550 = vadd.f32 %v549, 1.0
    %v551 = vmul.f32 %v550, %v518
    %v552 = vand.u32 2147483647, %v518
    %vm553 = vcmp.lt.f32.partialorder %v552, 0.0004427343
    %v554 = vsel %vm553, %v551, %v548
    %v555 = vsub.f32 %v499, %v527
    %v556 = vsub.f32 %v500, %v536
    %v557 = vsub.f32 %v501, %v545
    %v558 = vsub.f32 %v502, %v554
    %v559 = vmul.f32 %v555, %v414
    %v560 = vmul.f32 %v556, %v415
    %v561 = vmul.f32 %v557, %v416
    %v562 = vmul.f32 %v558, %v417
    %v563 = vsel %vm482, %v559, 0.0
    %v564 = vsel %vm482, %v560, 0.0
    %v565 = vadd.f32 %v563, %v564
    %v566 = vsel %vm482, %v561, 0.0
    %v567 = vadd.f32 %v565, %v566
    %v568 = vsel %vm482, %v562, 0.0
    %v569 = vadd.f32 %v567, %v568
    %570 = vadd.xlane.f32.xlu0 %v569
    %v571 = vpop.xlane.xlu0 %570
    %v572 = vrot.slane %v571, 4
    %v573 = vadd.f32 %v571, %v572
    %v574 = vrot.slane %v573, 2
    %v575 = vadd.f32 %v573, %v574
    %v576 = vrot.slane %v575, 1
    %v577 = vadd.f32 %v575, %v576
    %s578 = vtos %v577
    %vm579 = vcmp.gt.f32.partialorder %v79, 0.0
    %vm580 = vcmp.gt.f32.partialorder %v80, 0.0
    %vm581 = vcmp.gt.f32.partialorder %v81, 0.0
    %vm582 = vcmp.gt.f32.partialorder %v82, 0.0
    %vm583 = vcmp.gt.f32.partialorder %v83, 0.0
    %vm584 = vcmp.gt.f32.partialorder %v84, 0.0
    %vm585 = vcmp.gt.f32.partialorder %v85, 0.0
    %vm586 = vcmp.gt.f32.partialorder %v86, 0.0
    %v587 = vsel %vm579, 1, 0
    %v588 = vsel %vm580, 1, 0
    %v589 = vsel %vm581, 1, 0
    %v590 = vsel %vm582, 1, 0
    %v591 = vsel %vm583, 1, 0
    %v592 = vsel %vm584, 1, 0
    %v593 = vsel %vm585, 1, 0
    %v594 = vsel %vm586, 1, 0
    %v595 = vcvt.s32.f32 %v587
    %v596 = vcvt.s32.f32 %v588
    %v597 = vcvt.s32.f32 %v589
    %v598 = vcvt.s32.f32 %v590
    %v599 = vcvt.s32.f32 %v591
    %v600 = vcvt.s32.f32 %v592
    %v601 = vcvt.s32.f32 %v593
    %v602 = vcvt.s32.f32 %v594
    %v603 = vmul.f32 %v95, %v595
    %v604 = vmul.f32 %v96, %v596
    %v605 = vmul.f32 %v97, %v597
    %v606 = vmul.f32 %v98, %v598
    %v607 = vmul.f32 %v99, %v599
    %v608 = vmul.f32 %v100, %v600
    %v609 = vmul.f32 %v101, %v601
    %v610 = vmul.f32 %v102, %v602
    %v611 = vadd.f32 %v603, %v604
    %v612 = vadd.f32 %v611, %v605
    %v613 = vadd.f32 %v612, %v606
    %v614 = vadd.f32 %v613, %v607
    %v615 = vadd.f32 %v614, %v608
    %v616 = vadd.f32 %v615, %v609
    %v617 = vadd.f32 %v616, %v610
    %618 = vadd.xlane.f32.xlu0 %v617
    %v619 = vpop.xlane.xlu0 %618
    %v620 = vrot.slane %v619, 4
    %v621 = vadd.f32 %v619, %v620
    %v622 = vrot.slane %v621, 2
    %v623 = vadd.f32 %v621, %v622
    %v624 = vrot.slane %v623, 1
    %v625 = vadd.f32 %v623, %v624
    %s626 = vtos %v625
    %v627 = vadd.f32 %v595, %v596
    %v628 = vadd.f32 %v627, %v597
    %v629 = vadd.f32 %v628, %v598
    %v630 = vadd.f32 %v629, %v599
    %v631 = vadd.f32 %v630, %v600
    %v632 = vadd.f32 %v631, %v601
    %v633 = vadd.f32 %v632, %v602
    %634 = vadd.xlane.f32.xlu0 %v633
    %v635 = vpop.xlane.xlu0 %634
    %v636 = vrot.slane %v635, 4
    %v637 = vadd.f32 %v635, %v636
    %v638 = vrot.slane %v637, 2
    %v639 = vadd.f32 %v637, %v638
    %v640 = vrot.slane %v639, 1
    %v641 = vadd.f32 %v639, %v640
    %s642 = vtos %v641
    %vm643 = vcmp.eq.s32.totalorder %v396, 0
    %v644 = vstv %s498
    %v645 = vsel %vm643, %v644, 0.0
    %vm646 = vcmp.eq.s32.totalorder %v396, 1
    %v647 = vstv %s578
    %v648 = vsel %vm646, %v647, 0.0
    %v649 = vadd.f32 %v645, %v648
    %vm650 = vcmp.eq.s32.totalorder %v396, 2
    %v651 = vstv %s626
    %v652 = vsel %vm650, %v651, 0.0
    %v653 = vadd.f32 %v649, %v652
    %vm654 = vcmp.eq.s32.totalorder %v396, 3
    %v655 = vstv %s642
    %v656 = vsel %vm654, %v655, 0.0
    %v657 = vadd.f32 %v653, %v656
    %658 = vst [vmem:[#allocation8] sm:$0xff] %v657
    // Predicated region
    $region38: #{tpu_custom_call.1} parent=1 // pred_check
      _
    $region39: #{tpu_custom_call.1} parent=1 // pred_check_branch
      %660 = sbr.rel (0) target = $region41
    $region40: #{tpu_custom_call.1} parent=1 // pred_region
      %662 = vsyncadd [#allocation4], 0
      %s664 = sshll.u32 [#allocation8], 4
      %s665 = int_to_ptr.vmem [resolvable:$true] %s664
      %s666 = sshll.u32 %s6, 4
      %s667 = int_to_ptr.hbm [resolvable:$true] %s666
      %669 = dma.vmem_to_hbm [thread:$0]  %s665, 128, %s667, [#allocation4]
    $region41: #{tpu_custom_call.1} parent=1 // pred_fallthru
      _
    // Predicated region
    $region42: #{tpu_custom_call.1} parent=1 // pred_check
      _
    $region43: #{tpu_custom_call.1} parent=1 // pred_check_branch
      %671 = sbr.rel (0) target = $region45
    $region44: #{tpu_custom_call.1} parent=1 // pred_region
      %673 = dma.done [#allocation4], 128
    $region45: #{tpu_custom_call.1} parent=1 // pred_fallthru
      _
    %674 = vsyncpa [#allocation3], 1
    %675 = vsyncpa [#allocation6], 1
    %676 = vsyncpa [#allocation4], 1

</llo_original>
